<compile_context>
chip_gen: v6e
topology: v6e:2x2x1
jax: 0.10.0
libtpu: 0.0.40
codegen_flags: <defaults>
</compile_context>

<pallas_src>
import jax
import jax.numpy as jnp
from jax.experimental import pallas as pl
from jax.experimental.pallas import tpu as pltpu


def _linear_kernel(x_ref, w_ref, b_ref, o_ref):
    # x_ref: (tb, D) streamed VMEM tile; w_ref: (D, 1) resident weight column;
    # b_ref: (1,) scalar in SMEM; o_ref: (tb, 1).
    acc = jnp.dot(x_ref[...], w_ref[...], preferred_element_type=jnp.float32)
    o_ref[...] = (acc + b_ref[0]).astype(o_ref.dtype)


def _select_batch_tile(batch, dim, itemsize, budget_bytes):
    """Pick a batch tile (multiple of 8, or == batch) from a VMEM byte budget."""
    row_bytes = max(dim * itemsize, 1)
    total_bytes = batch * row_bytes
    if total_bytes <= budget_bytes:
        # Whole batch fits in one tile.  If the tile is big enough that the
        # per-grid-step overhead is negligible, split into >= 2 tiles so the
        # "parallel" axis can use both v7x TensorCores.
        if batch >= 16 and total_bytes >= (1 << 20):
            half = (batch + 1) // 2
            return min(batch, ((half + 7) // 8) * 8)
        return batch
    rows = budget_bytes // row_bytes
    rows = max(8, (rows // 8) * 8)
    return min(rows, batch)


def confnet_greybox_forward(x, weight, bias, *, tile_budget_bytes=4 << 20):
    """ConfNetGreyBox forward: out = x @ weight.T + bias.

    x: (batch, dim); weight: (1, dim) (PyTorch nn.Linear layout); bias: (1,).
    Returns (batch, 1) in x.dtype.
    """
    batch, dim = x.shape
    assert weight.shape == (1, dim)
    assert bias.shape == (1,)

    itemsize = jnp.dtype(x.dtype).itemsize
    tb = _select_batch_tile(batch, dim, itemsize, tile_budget_bytes)
    grid = (pl.cdiv(batch, tb),)

    # Resident weight column for the MXU: (dim, 1).
    w_col = weight.reshape(dim, 1)

    # VMEM footprint: double-buffered x, resident-but-conservatively-2x weight
    # column (last dim 1 pads to 128 lanes), lane-padded (tb, 1) output.
    x_bufs = 2 * tb * dim * itemsize
    w_bufs = 2 * dim * 128 * itemsize
    o_bufs = 2 * tb * 128 * itemsize
    vmem_limit = int(min(max(x_bufs + w_bufs + o_bufs + (2 << 20), 16 << 20),
                         48 << 20))

    cost = pl.CostEstimate(
        flops=2 * batch * dim,
        bytes_accessed=(batch * dim + dim + batch) * itemsize,
        transcendentals=0,
    )

    return pl.pallas_call(
        _linear_kernel,
        out_shape=jax.ShapeDtypeStruct((batch, 1), x.dtype),
        grid=grid,
        in_specs=[
            pl.BlockSpec((tb, dim), lambda i: (i, 0)),            # streamed x
            pl.BlockSpec((dim, 1), lambda i: (0, 0)),             # resident W col
            pl.BlockSpec(memory_space=pltpu.MemorySpace.SMEM),    # scalar bias
        ],
        out_specs=pl.BlockSpec((tb, 1), lambda i: (i, 0)),
        compiler_params=pltpu.CompilerParams(
            dimension_semantics=("parallel",),
            vmem_limit_bytes=vmem_limit,
        ),
        cost_estimate=cost,
    )(x, w_col, bias)


if __name__ == "__main__":
    key = jax.random.PRNGKey(0)
    kx, kw, kb = jax.random.split(key, 3)

    # Small shapes consistent with the module: batch=8, dim=32.
    batch, dim = 8, 32
    x = jax.random.normal(kx, (batch, dim), dtype=jnp.float32)
    bound = 1.0 / (dim ** 0.5)
    weight = jax.random.uniform(kw, (1, dim), minval=-bound, maxval=bound,
                                dtype=jnp.float32)
    bias = jax.random.uniform(kb, (1,), minval=-bound, maxval=bound,
                              dtype=jnp.float32)

    out = confnet_greybox_forward(x, weight, bias)
    jax.block_until_ready(out)

    ref = jnp.dot(x, weight.T, precision=jax.lax.Precision.HIGHEST) + bias
    assert out.shape == (batch, 1)
    assert jnp.allclose(out, ref, atol=1e-2, rtol=1e-2)

    # Second check: multi-tile grid with a partial last tile (batch % tb != 0),
    # forced via a tiny tile budget, to lock in masked boundary stores.
    batch2, dim2 = 52, 256
    x2 = jax.random.normal(kx, (batch2, dim2), dtype=jnp.float32)
    bound2 = 1.0 / (dim2 ** 0.5)
    w2 = jax.random.uniform(kw, (1, dim2), minval=-bound2, maxval=bound2,
                            dtype=jnp.float32)
    b2 = jax.random.uniform(kb, (1,), minval=-bound2, maxval=bound2,
                            dtype=jnp.float32)
    out2 = confnet_greybox_forward(x2, w2, b2, tile_budget_bytes=16 << 10)
    jax.block_until_ready(out2)
    ref2 = jnp.dot(x2, w2.T, precision=jax.lax.Precision.HIGHEST) + b2
    assert out2.shape == (batch2, 1)
    assert jnp.allclose(out2, ref2, atol=1e-2, rtol=1e-2)

    print("KERNEL_OK")
</pallas_src>

<mosaic_0001>
module attributes {stable_mosaic.version = 11 : i64} {
  func.func @_linear_kernel(%arg0: i32, %arg1: memref<8x32xf32, #tpu.memory_space<vmem>>, %arg2: memref<32x1xf32, #tpu.memory_space<vmem>>, %arg3: memref<1xf32, #tpu.memory_space<smem>>, %arg4: memref<8x1xf32, #tpu.memory_space<vmem>>) attributes {dimension_semantics = [#tpu.dimension_semantics<parallel>], iteration_bounds = array<i64: 1>, scalar_prefetch = 0 : i64, scratch_operands = 0 : i64, tpu.core_type = #tpu.core_type<tc>, window_params = [{transform_indices = @transform_0, window_bounds = array<i64: 8, 32>}, {pipeline_mode = #tpu.pipeline_mode<synchronous>, transform_indices = @transform_1, window_bounds = array<i64: 32, 1>}, {transform_indices = @transform_2, window_bounds = array<i64: 1>}, {transform_indices = @transform_3, window_bounds = array<i64: 8, 1>}]} {
    %c0 = arith.constant 0 : index
    %c0_0 = arith.constant 0 : index
    %0 = vector.load %arg1[%c0, %c0_0] : memref<8x32xf32, #tpu.memory_space<vmem>>, vector<8x32xf32>
    %c0_1 = arith.constant 0 : index
    %c0_2 = arith.constant 0 : index
    %1 = vector.load %arg2[%c0_1, %c0_2] : memref<32x1xf32, #tpu.memory_space<vmem>>, vector<32x1xf32>
    %cst = arith.constant dense<0.000000e+00> : vector<8x1xf32>
    %2 = tpu.matmul %0, %1, %cst {dimension_numbers = #tpu.dot_dimension_numbers<[1], [0], [0], [1], [0, 0, 1, 1], [], []>} : vector<8x32xf32>, vector<32x1xf32>, vector<8x1xf32> -> vector<8x1xf32>
    %c0_3 = arith.constant 0 : index
    %3 = memref.load %arg3[%c0_3] : memref<1xf32, #tpu.memory_space<smem>>
    %4 = vector.broadcast %3 : f32 to vector<8x1xf32>
    %5 = arith.addf %2, %4 : vector<8x1xf32>
    %c0_4 = arith.constant 0 : index
    %c0_5 = arith.constant 0 : index
    %6 = vector.load %arg4[%c0_4, %c0_5] : memref<8x1xf32, #tpu.memory_space<vmem>>, vector<8x1xf32>
    tpu.vector_store %arg4[%c0_4, %c0_5], %5 {strides = array<i32>} : memref<8x1xf32, #tpu.memory_space<vmem>>, vector<8x1xf32>,
    return
  }
  func.func @transform_0(%arg0: i32) -> (i32, i32) {
    %c0_i32 = arith.constant 0 : i32
    %c0_i32_0 = arith.constant 0 : i32
    return %arg0, %c0_i32 : i32, i32
  }
  func.func @transform_1(%arg0: i32) -> (i32, i32) {
    %c0_i32 = arith.constant 0 : i32
    %c0_i32_0 = arith.constant 0 : i32
    %c0_i32_1 = arith.constant 0 : i32
    return %c0_i32, %c0_i32_0 : i32, i32
  }
  func.func @transform_2(%arg0: i32) -> i32 {
    %c0_i32 = arith.constant 0 : i32
    %c0_i32_0 = arith.constant 0 : i32
    return %c0_i32 : i32
  }
  func.func @transform_3(%arg0: i32) -> (i32, i32) {
    %c0_i32 = arith.constant 0 : i32
    %c0_i32_0 = arith.constant 0 : i32
    return %arg0, %c0_i32 : i32, i32
  }
}

</mosaic_0001>

<llo_original>
// kernel: tpu_custom_call.1
$region0: #{tpu_custom_call.1}
  #allocation0 [shape = 'u32[]', space=smem, size = 0x4, offset = 0x4, fixed_abs, tag = 'smem constant byte address 0x4 - core index']
  #allocation1 [shape = 'u32[144,128]{1,0:T(1,128)}', space=vmem, size = 0x12000, scoped, tag = 'internal scratch']
  #allocation2 [shape = 'f32[1]{0:T(128)S(6)}', space=smem, size = 0x200, scoped, tag = 'scoped memory for tpu_custom_call.1']
  %s0 = inlined_call_operand.vmem [shape: f32[8,32], index: 0, kind: input, shape index: {}]
  %s1 = inlined_call_operand.vmem [shape: f32[32,1], index: 1, kind: input, shape index: {}]
  %s2 = inlined_call_operand.<no memory space> [shape: f32[1], index: 2, kind: input, shape index: {}]
  %s3 = inlined_call_operand.vmem [shape: f32[8,1], index: 3, kind: output, shape index: {}]
  %s4 = sld [smem:[#allocation0]]
  $region22: #{tpu_custom_call.1} parent=0
    _
  %s6 = ssub.s32 1, %s4
  %s7 = scalar_select 0, %s6, %s4
  %8 = sst [smem:[#allocation2]] %s2
  // Predicated region
  $region2: #{tpu_custom_call.1} parent=0 // pred_check
    _
  $region3: #{tpu_custom_call.1} parent=0 // pred_check_branch
    %10 = sbr.rel (0) target = $region5
  $region4: #{tpu_custom_call.1} parent=0 // pred_region
    _
  $region5: #{tpu_custom_call.1} parent=0 // pred_fallthru
    _
  // Predicated region
  $region6: #{tpu_custom_call.1} parent=0 // pred_check
    _
  $region7: #{tpu_custom_call.1} parent=0 // pred_check_branch
    %12 = sbr.rel (0) target = $region9
  $region8: #{tpu_custom_call.1} parent=0 // pred_region
    _
  $region9: #{tpu_custom_call.1} parent=0 // pred_fallthru
    _
  // Predicated region
  $region10: #{tpu_custom_call.1} parent=0 // pred_check
    _
  $region11: #{tpu_custom_call.1} parent=0 // pred_check_branch
    %14 = sbr.rel (0) target = $region13
  $region12: #{tpu_custom_call.1} parent=0 // pred_region
    _
  $region13: #{tpu_custom_call.1} parent=0 // pred_fallthru
    _
  %v15 = vld [vmem:[%s0] sm:$0xff]
  %v16 = vld [vmem:[%s1] sm:$0xff]
  %v17 = vld [vmem:[%s1 + $0x8] sm:$0xff]
  %v18 = vld [vmem:[%s1 + $0x10] sm:$0xff]
  %v19 = vld [vmem:[%s1 + $0x18] sm:$0xff]
  %s20 = sld [smem:[#allocation2]]
  %v21 = vstv %s20
  %vm22 = vcmask 261120
  %v24 = vsel %vm22, %v15, 0
  %26 = vmatprep.subr.mxu0 0.0
  %27 = vmatpush1.msra.mxu0 0.0
  %28 = vmatprep.subr.mxu0 0.0
  %29 = vmatpush1.msra.mxu0 0.0
  %30 = vmatprep.subr.mxu0 0.0
  %31 = vmatpush1.msra.mxu0 0.0
  %32 = vmatprep.subr.mxu0 0.0
  %33 = vmatpush1.msra.mxu0 0.0
  %34 = vmatprep.subr.mxu0 0.0
  %35 = vmatpush1.msra.mxu0 0.0
  %36 = vmatprep.subr.mxu0 0.0
  %37 = vmatpush1.msra.mxu0 0.0
  %38 = vmatprep.subr.mxu0 0.0
  %39 = vmatpush1.msra.mxu0 0.0
  %40 = vmatprep.subr.mxu0 0.0
  %41 = vmatpush1.msra.mxu0 0.0
  %42 = vmatprep.subr.mxu0 0.0
  %43 = vmatpush1.msra.mxu0 0.0
  %44 = vmatprep.subr.mxu0 0.0
  %45 = vmatpush1.msra.mxu0 0.0
  %46 = vmatprep.subr.mxu0 0.0
  %47 = vmatpush1.msra.mxu0 0.0
  %48 = vmatprep.subr.mxu0 0.0
  %49 = vmatpush1.msra.mxu0 0.0
  %50 = vmatprep.subr.mxu0 0.0
  %51 = vmatpush1.msra.mxu0 %v19
  %52 = vmatprep.subr.mxu0 0.0
  %53 = vmatpush1.msra.mxu0 %v18
  %54 = vmatprep.subr.mxu0 0.0
  %55 = vmatpush1.msra.mxu0 %v17
  %56 = vmatprep.subr.mxu0 0.0
  %57 = vmatpush1.msra.mxu0 %v16
  %58 = vmatprep.subr.mxu0 0.0
  %59 = vmatpush2.msra.mxu0 0.0
  %60 = vmatprep.subr.mxu0 0.0
  %61 = vmatpush2.msra.mxu0 0.0
  %62 = vmatprep.subr.mxu0 0.0
  %63 = vmatpush2.msra.mxu0 0.0
  %64 = vmatprep.subr.mxu0 0.0
  %65 = vmatpush2.msra.mxu0 0.0
  %66 = vmatprep.subr.mxu0 0.0
  %67 = vmatpush2.msra.mxu0 0.0
  %68 = vmatprep.subr.mxu0 0.0
  %69 = vmatpush2.msra.mxu0 0.0
  %70 = vmatprep.subr.mxu0 0.0
  %71 = vmatpush2.msra.mxu0 0.0
  %72 = vmatprep.subr.mxu0 0.0
  %73 = vmatpush2.msra.mxu0 0.0
  %74 = vmatprep.subr.mxu0 0.0
  %75 = vmatpush2.msra.mxu0 0.0
  %76 = vmatprep.subr.mxu0 0.0
  %77 = vmatpush2.msra.mxu0 0.0
  %78 = vmatprep.subr.mxu0 0.0
  %79 = vmatpush2.msra.mxu0 0.0
  %80 = vmatprep.subr.mxu0 0.0
  %81 = vmatpush2.msra.mxu0 0.0
  %82 = vmatprep.subr.mxu0 0.0
  %83 = vmatpush2.msra.mxu0 0.0
  %84 = vmatprep.subr.mxu0 0.0
  %85 = vmatpush2.msra.mxu0 0.0
  %86 = vmatprep.subr.mxu0 0.0
  %87 = vmatpush2.msra.mxu0 0.0
  %88 = vmatprep.subr.mxu0 0.0
  %89 = vmatpush2.msra.mxu0 0.0
  %90 = vmatprep.mubr.f32.mxu0 0.0
  %91 = vmatmul.mubr.f32.gmra.mxu0 %v24
  %v92 = vpop.f32.mrf.mxu0
  %v93 = vadd.f32 %v21, %v92
  %v94 = vpop.f32.mrf.mxu0
  %95 = vdwg.mxu0
  %vm96 = vcmask 7168
  %97 = vst.msk [vmem:[%s3] sm:$0xff] %vm96, %v93
  // Predicated region
  $region14: #{tpu_custom_call.1} parent=0 // pred_check
    _
  $region15: #{tpu_custom_call.1} parent=0 // pred_check_branch
    %99 = sbr.rel (0) target = $region17
  $region16: #{tpu_custom_call.1} parent=0 // pred_region
    _
  $region17: #{tpu_custom_call.1} parent=0 // pred_fallthru
    _
  // Predicated region
  $region18: #{tpu_custom_call.1} parent=0 // pred_check
    _
  $region19: #{tpu_custom_call.1} parent=0 // pred_check_branch
    %101 = sbr.rel (0) target = $region21
  $region20: #{tpu_custom_call.1} parent=0 // pred_region
    _
  $region21: #{tpu_custom_call.1} parent=0 // pred_fallthru
    _

</llo_original>
